<compile_context>
chip_gen: v6e
topology: v6e:2x2x1
jax: 0.10.0
libtpu: 0.0.40
codegen_flags: <defaults>
</compile_context>

<pallas_src>
import functools
import math

import jax
import jax.numpy as jnp
from jax.experimental import pallas as pl
from jax.experimental.pallas import tpu as pltpu


def _cdiv(a, b):
    return (a + b - 1) // b


def _round_up(a, b):
    return _cdiv(a, b) * b


def _fused_mlp_kernel(*refs, n_layers, last_activation):
    """One grid step: run the full MLP stack on one (tile_r, K_grouped) x-tile.

    refs = (x_ref, w1_ref, b1_ref, ..., wL_ref, bL_ref, o_ref)
    Matmuls feed the MXU in the weight dtype (bf16 by default) with f32
    accumulation; bias add + ReLU run in f32; one cast at the final store.
    """
    x_ref, o_ref = refs[0], refs[-1]
    wb_refs = refs[1:-1]

    h = x_ref[...]
    for i in range(n_layers):
        w_ref = wb_refs[2 * i]
        b_ref = wb_refs[2 * i + 1]
        y = jnp.dot(h.astype(w_ref.dtype), w_ref[...],
                    preferred_element_type=jnp.float32)
        y = y + b_ref[...]                      # bias in f32
        if i < n_layers - 1 or last_activation:
            y = jnp.maximum(y, 0.0)             # ReLU in f32
        h = y
    o_ref[...] = h.astype(o_ref.dtype)


def _block_diag(w, g):
    """(K, N) -> (g*K, g*N) block-diagonal replication of w."""
    return jnp.kron(jnp.eye(g, dtype=w.dtype), w)


def _tensorcores_per_chip():
    """Best-effort detection of TensorCores sharing one Pallas grid."""
    try:
        kind = jax.devices()[0].device_kind.lower()
    except Exception:
        return 1
    for tag in ("7x", "v7", "v5p", "v4"):   # megacore / dual-TC parts
        if tag in kind:
            return 2
    return 1                                 # v5e / v6e: single TC


def _choose_tile_rows(m_g, tile_rows_max, n_cores):
    """Pick the grouped-row tile size.

    Single-TC: the grid is a serial loop -> one big tile if it fits.
    Multi-TC:  aim for an even multiple of the core count of grid steps.
    Always a multiple of 16 (bf16 sublane packing, v5e-friendly).
    """
    tile_rows_max = max(16, _round_up(tile_rows_max, 16))
    if n_cores <= 1:
        return min(tile_rows_max, _round_up(m_g, 16))
    target_steps = max(2 * n_cores, _cdiv(m_g, tile_rows_max))
    target_steps = _round_up(target_steps, n_cores)
    tile = _round_up(max(1, _cdiv(m_g, target_steps)), 16)
    return max(16, min(tile_rows_max, tile))


def mlp_layers_forward(x, params, *, last_activation=True,
                       compute_dtype=jnp.bfloat16, tile_rows_max=1024):
    """Pallas implementation of MLPLayers.forward.

    x: (N, *, H_in) -> (N, *, H_out).  params: list of (W(in,out), b(1,out)).
    """
    orig_shape = x.shape
    h_in = orig_shape[-1]
    assert h_in == params[0][0].shape[0]
    out_dim = params[-1][0].shape[1]
    n_layers = len(params)

    x2d = x.reshape(-1, h_in)
    m = x2d.shape[0]

    # Row-group factor: grouped output width out_dim*g is a multiple of 128
    # so the kernel's output slab (M/g, out_dim*g) stores lane-dense.
    g = 128 // math.gcd(out_dim, 128)

    # Block-diagonal weights (compute_dtype for the MXU) + lane-tiled f32 bias.
    grouped = []
    for (w, b) in params:
        wg = _block_diag(w.astype(jnp.float32), g).astype(compute_dtype)
        bg = jnp.tile(b.reshape(1, -1).astype(jnp.float32), (1, g))
        grouped.append((wg, bg))

    k_g = h_in * g
    n_g = out_dim * g

    # Group rows.  Only pad if m is not a multiple of g (<= g-1 rows); the
    # reshape itself is a free metadata op on a contiguous row-major array.
    m_g = _cdiv(m, g)
    m_pad = m_g * g
    if m_pad != m:
        x2d = jnp.pad(x2d, ((0, m_pad - m), (0, 0)))
    xg = x2d.reshape(m_g, k_g)          # caller dtype; NO bf16 copy in HBM

    n_cores = _tensorcores_per_chip()
    tile_r = _choose_tile_rows(m_g, tile_rows_max, n_cores)
    grid = (_cdiv(m_g, tile_r),)        # ragged last block: OOB reads padded,
                                        # OOB stores masked by Pallas.

    in_specs = [pl.BlockSpec((tile_r, k_g), lambda i: (i, 0))]
    flat_wb = []
    for wg, bg in grouped:
        in_specs.append(pl.BlockSpec(wg.shape, lambda i: (0, 0)))
        in_specs.append(pl.BlockSpec(bg.shape, lambda i: (0, 0)))
        flat_wb += [wg, bg]

    out_dtype = x.dtype                 # store directly in caller dtype
    out_specs = pl.BlockSpec((tile_r, n_g), lambda i: (i, 0))

    flops = 2 * m_g * sum(int(wg.shape[0]) * int(wg.shape[1])
                          for wg, _ in grouped)
    bytes_accessed = (int(xg.size) * xg.dtype.itemsize
                      + sum(int(wg.size) * wg.dtype.itemsize
                            + int(bg.size) * bg.dtype.itemsize
                            for wg, bg in grouped)
                      + m_g * n_g * jnp.dtype(out_dtype).itemsize)

    kernel = functools.partial(_fused_mlp_kernel, n_layers=n_layers,
                               last_activation=last_activation)

    out_g = pl.pallas_call(
        kernel,
        out_shape=jax.ShapeDtypeStruct((m_g, n_g), out_dtype),
        grid_spec=pltpu.PrefetchScalarGridSpec(
            num_scalar_prefetch=0,
            grid=grid,
            in_specs=in_specs,
            out_specs=out_specs,
        ),
        compiler_params=pltpu.CompilerParams(
            dimension_semantics=("parallel",),
            vmem_limit_bytes=32 * 1024 * 1024,
        ),
        cost_estimate=pl.CostEstimate(flops=int(flops), transcendentals=0,
                                      bytes_accessed=int(bytes_accessed)),
    )(xg, *flat_wb)

    # Free, wrapper-side ungrouping (metadata reshape); slice only if padded.
    out = out_g.reshape(m_pad, out_dim)
    if m_pad != m:
        out = out[:m]
    return out.reshape(orig_shape[:-1] + (out_dim,))


def init_mlp_params(layers, key):
    """Deterministic parameter init (shapes match nn.Linear(in, out))."""
    params = []
    for fan_in, fan_out in zip(layers[:-1], layers[1:]):
        key, wk, bk = jax.random.split(key, 3)
        std = (2.0 / (fan_in + fan_out)) ** 0.5   # xavier-normal-ish
        w = std * jax.random.normal(wk, (fan_in, fan_out), dtype=jnp.float32)
        b = 0.01 * jax.random.normal(bk, (1, fan_out), dtype=jnp.float32)
        params.append((w, b))
    return params


def _reference_forward(x, params, last_activation=True,
                       compute_dtype=jnp.bfloat16):
    """Pure-JAX reference using the same dtype policy as the kernel."""
    h = x.reshape(-1, x.shape[-1])
    n = len(params)
    for idx, (w, b) in enumerate(params):
        h = jnp.dot(h.astype(compute_dtype), w.astype(compute_dtype),
                    preferred_element_type=jnp.float32)
        h = h + b.reshape(1, -1).astype(jnp.float32)
        if idx < n - 1 or last_activation:
            h = jnp.maximum(h, 0.0)
    return h.astype(x.dtype).reshape(x.shape[:-1] + (h.shape[-1],))


if __name__ == "__main__":
    layers = [64, 32, 16]          # as in the module docstring example
    batch = 256                    # small DCN-style batch

    key = jax.random.PRNGKey(0)
    key, xk = jax.random.split(key)
    x = jax.random.normal(xk, (batch, layers[0]), dtype=jnp.float32)
    params = init_mlp_params(layers, key)

    out = mlp_layers_forward(x, params, last_activation=True)
    out = jax.block_until_ready(out)

    ref = _reference_forward(x, params, last_activation=True)
    assert out.shape == (batch, layers[-1])
    err = float(jnp.max(jnp.abs(out - ref)))
    assert jnp.allclose(out, ref, atol=2e-3, rtol=2e-3), err

    print("KERNEL_OK")
</pallas_src>

<mosaic_0001>
module attributes {stable_mosaic.version = 11 : i64} {
  func.func @_fused_mlp_kernel(%arg0: i32, %arg1: memref<32x512xf32, #tpu.memory_space<vmem>>, %arg2: memref<512x256xbf16, #tpu.memory_space<vmem>>, %arg3: memref<1x256xf32, #tpu.memory_space<vmem>>, %arg4: memref<256x128xbf16, #tpu.memory_space<vmem>>, %arg5: memref<1x128xf32, #tpu.memory_space<vmem>>, %arg6: memref<32x128xf32, #tpu.memory_space<vmem>>) attributes {dimension_semantics = [#tpu.dimension_semantics<parallel>], iteration_bounds = array<i64: 1>, scalar_prefetch = 0 : i64, scratch_operands = 0 : i64, tpu.core_type = #tpu.core_type<tc>, window_params = [{transform_indices = @transform_0, window_bounds = array<i64: 32, 512>}, {pipeline_mode = #tpu.pipeline_mode<synchronous>, transform_indices = @transform_1, window_bounds = array<i64: 512, 256>}, {pipeline_mode = #tpu.pipeline_mode<synchronous>, transform_indices = @transform_2, window_bounds = array<i64: 1, 256>}, {pipeline_mode = #tpu.pipeline_mode<synchronous>, transform_indices = @transform_3, window_bounds = array<i64: 256, 128>}, {pipeline_mode = #tpu.pipeline_mode<synchronous>, transform_indices = @transform_4, window_bounds = array<i64: 1, 128>}, {transform_indices = @transform_5, window_bounds = array<i64: 32, 128>}]} {
    %c0 = arith.constant 0 : index
    %c0_0 = arith.constant 0 : index
    %0 = vector.load %arg1[%c0, %c0_0] : memref<32x512xf32, #tpu.memory_space<vmem>>, vector<32x512xf32>
    %1 = arith.truncf %0 : vector<32x512xf32> to vector<32x512xbf16>
    %c0_1 = arith.constant 0 : index
    %c0_2 = arith.constant 0 : index
    %2 = vector.load %arg2[%c0_1, %c0_2] : memref<512x256xbf16, #tpu.memory_space<vmem>>, vector<512x256xbf16>
    %cst = arith.constant dense<0.000000e+00> : vector<32x256xf32>
    %3 = tpu.matmul %1, %2, %cst {dimension_numbers = #tpu.dot_dimension_numbers<[1], [0], [0], [1], [0, 0, 1, 1], [], []>} : vector<32x512xbf16>, vector<512x256xbf16>, vector<32x256xf32> -> vector<32x256xf32>
    %c0_3 = arith.constant 0 : index
    %c0_4 = arith.constant 0 : index
    %4 = vector.load %arg3[%c0_3, %c0_4] : memref<1x256xf32, #tpu.memory_space<vmem>>, vector<1x256xf32>
    %5 = vector.broadcast %4 : vector<1x256xf32> to vector<32x256xf32>
    %6 = arith.addf %3, %5 : vector<32x256xf32>
    %cst_5 = arith.constant 0.000000e+00 : f32
    %7 = vector.broadcast %cst_5 : f32 to vector<32x256xf32>
    %8 = arith.maximumf %6, %7 : vector<32x256xf32>
    %9 = arith.truncf %8 : vector<32x256xf32> to vector<32x256xbf16>
    %c0_6 = arith.constant 0 : index
    %c0_7 = arith.constant 0 : index
    %10 = vector.load %arg4[%c0_6, %c0_7] : memref<256x128xbf16, #tpu.memory_space<vmem>>, vector<256x128xbf16>
    %cst_8 = arith.constant dense<0.000000e+00> : vector<32x128xf32>
    %11 = tpu.matmul %9, %10, %cst_8 {dimension_numbers = #tpu.dot_dimension_numbers<[1], [0], [0], [1], [0, 0, 1, 1], [], []>} : vector<32x256xbf16>, vector<256x128xbf16>, vector<32x128xf32> -> vector<32x128xf32>
    %c0_9 = arith.constant 0 : index
    %c0_10 = arith.constant 0 : index
    %12 = vector.load %arg5[%c0_9, %c0_10] : memref<1x128xf32, #tpu.memory_space<vmem>>, vector<1x128xf32>
    %13 = vector.broadcast %12 : vector<1x128xf32> to vector<32x128xf32>
    %14 = arith.addf %11, %13 : vector<32x128xf32>
    %cst_11 = arith.constant 0.000000e+00 : f32
    %15 = vector.broadcast %cst_11 : f32 to vector<32x128xf32>
    %16 = arith.maximumf %14, %15 : vector<32x128xf32>
    %c0_12 = arith.constant 0 : index
    %c0_13 = arith.constant 0 : index
    %17 = vector.load %arg6[%c0_12, %c0_13] : memref<32x128xf32, #tpu.memory_space<vmem>>, vector<32x128xf32>
    tpu.vector_store %arg6[%c0_12, %c0_13], %16 {strides = array<i32>} : memref<32x128xf32, #tpu.memory_space<vmem>>, vector<32x128xf32>,
    return
  }
  func.func @transform_0(%arg0: i32) -> (i32, i32) {
    %c0_i32 = arith.constant 0 : i32
    %c0_i32_0 = arith.constant 0 : i32
    return %arg0, %c0_i32 : i32, i32
  }
  func.func @transform_1(%arg0: i32) -> (i32, i32) {
    %c0_i32 = arith.constant 0 : i32
    %c0_i32_0 = arith.constant 0 : i32
    %c0_i32_1 = arith.constant 0 : i32
    return %c0_i32, %c0_i32_0 : i32, i32
  }
  func.func @transform_2(%arg0: i32) -> (i32, i32) {
    %c0_i32 = arith.constant 0 : i32
    %c0_i32_0 = arith.constant 0 : i32
    %c0_i32_1 = arith.constant 0 : i32
    return %c0_i32, %c0_i32_0 : i32, i32
  }
  func.func @transform_3(%arg0: i32) -> (i32, i32) {
    %c0_i32 = arith.constant 0 : i32
    %c0_i32_0 = arith.constant 0 : i32
    %c0_i32_1 = arith.constant 0 : i32
    return %c0_i32, %c0_i32_0 : i32, i32
  }
  func.func @transform_4(%arg0: i32) -> (i32, i32) {
    %c0_i32 = arith.constant 0 : i32
    %c0_i32_0 = arith.constant 0 : i32
    %c0_i32_1 = arith.constant 0 : i32
    return %c0_i32, %c0_i32_0 : i32, i32
  }
  func.func @transform_5(%arg0: i32) -> (i32, i32) {
    %c0_i32 = arith.constant 0 : i32
    %c0_i32_0 = arith.constant 0 : i32
    return %arg0, %c0_i32 : i32, i32
  }
}

</mosaic_0001>

<llo_original>
// kernel: tpu_custom_call.1
$region0: #{tpu_custom_call.1}
  #allocation0 [shape = 'u32[]', space=smem, size = 0x4, offset = 0x4, fixed_abs, tag = 'smem constant byte address 0x4 - core index']
  #allocation1 [shape = 'u32[144,128]{1,0:T(1,128)}', space=vmem, size = 0x12000, scoped, tag = 'internal scratch']
  %s0 = inlined_call_operand.hbm [shape: f32[32,512], index: 0, kind: input, shape index: {}]
  %s1 = inlined_call_operand.hbm [shape: bf16[512,256], index: 1, kind: input, shape index: {}]
  %s2 = inlined_call_operand.vmem [shape: f32[1,256], index: 2, kind: input, shape index: {}]
  %s3 = inlined_call_operand.hbm [shape: bf16[256,128], index: 3, kind: input, shape index: {}]
  %s4 = inlined_call_operand.vmem [shape: f32[1,128], index: 4, kind: input, shape index: {}]
  %s5 = inlined_call_operand.hbm [shape: f32[32,128], index: 5, kind: output, shape index: {}]
  %s6 = sld [smem:[#allocation0]]
  $region42: #{tpu_custom_call.1} parent=0
    _
  %s8 = ssub.s32 1, %s6
  %s9 = scalar_select 0, %s8, %s6
  $region1: #{tpu_custom_call.1} parent=0
    #allocation2 [shape = 'u8[65536]{0}', space=vmem, size = 0x10000, scoped, tag = 'input window, operand 0, single buffered']
    #allocation3 [shape = 's32[1]{0}', space=sflag, size = 0x4, scoped, tag = 'scoped memory for tpu_custom_call.1']
    #allocation4 [shape = 's32[1]{0}', space=sflag, size = 0x4, scoped, tag = 'scoped memory for tpu_custom_call.1']
    #allocation5 [shape = 'u8[262144]{0}', space=vmem, size = 0x40000, scoped, tag = 'input window, operand 1, single buffered']
    #allocation6 [shape = 's32[1]{0}', space=sflag, size = 0x4, scoped, tag = 'scoped memory for tpu_custom_call.1']
    #allocation7 [shape = 'u8[65536]{0}', space=vmem, size = 0x10000, scoped, tag = 'input window, operand 3, single buffered']
    #allocation8 [shape = 'u8[16384]{0}', space=vmem, size = 0x4000, scoped, tag = 'output window, operand 0, single buffered']
    %10 = vsyncpa [#allocation3], 0
    %11 = vsyncpa [#allocation6], 0
    %12 = vsyncpa [#allocation4], 0
    // Predicated region
    $region2: #{tpu_custom_call.1} parent=1 // pred_check
      _
    $region3: #{tpu_custom_call.1} parent=1 // pred_check_branch
      %14 = sbr.rel (0) target = $region5
    $region4: #{tpu_custom_call.1} parent=1 // pred_region
      %s16 = ssub.s32 2048, 2048
      %17 = vsyncadd [#allocation3], %s16
      %s18 = sshll.u32 [#allocation2], 4
      %s19 = int_to_ptr.vmem [resolvable:$true] %s18
      %24 = dma.hbm_to_vmem [thread:$0]  %s0, 2048, %s19, [#allocation3], 512, 512, 32
    $region5: #{tpu_custom_call.1} parent=1 // pred_fallthru
      _
    // Predicated region
    $region6: #{tpu_custom_call.1} parent=1 // pred_check
      _
    $region7: #{tpu_custom_call.1} parent=1 // pred_check_branch
      %26 = sbr.rel (0) target = $region9
    $region8: #{tpu_custom_call.1} parent=1 // pred_region
      %s28 = ssub.s32 8192, 8192
      %29 = vsyncadd [#allocation6], %s28
      %s30 = sshll.u32 [#allocation5], 4
      %s31 = int_to_ptr.vmem [resolvable:$true] %s30
      %36 = dma.hbm_to_vmem [thread:$0]  %s1, 8192, %s31, [#allocation6], 128, 128, 8
    $region9: #{tpu_custom_call.1} parent=1 // pred_fallthru
      _
    // Predicated region
    $region10: #{tpu_custom_call.1} parent=1 // pred_check
      _
    $region11: #{tpu_custom_call.1} parent=1 // pred_check_branch
      %38 = sbr.rel (0) target = $region13
    $region12: #{tpu_custom_call.1} parent=1 // pred_region
      _
    $region13: #{tpu_custom_call.1} parent=1 // pred_fallthru
      _
    // Predicated region
    $region14: #{tpu_custom_call.1} parent=1 // pred_check
      _
    $region15: #{tpu_custom_call.1} parent=1 // pred_check_branch
      %40 = sbr.rel (0) target = $region17
    $region16: #{tpu_custom_call.1} parent=1 // pred_region
      %s42 = ssub.s32 2048, 2048
      %43 = vsyncadd [#allocation6], %s42
      %s44 = sshll.u32 [#allocation7], 4
      %s45 = int_to_ptr.vmem [resolvable:$true] %s44
      %50 = dma.hbm_to_vmem [thread:$0]  %s3, 2048, %s45, [#allocation6], 64, 64, 4
    $region17: #{tpu_custom_call.1} parent=1 // pred_fallthru
      _
    // Predicated region
    $region18: #{tpu_custom_call.1} parent=1 // pred_check
      _
    $region19: #{tpu_custom_call.1} parent=1 // pred_check_branch
      %52 = sbr.rel (0) target = $region21
    $region20: #{tpu_custom_call.1} parent=1 // pred_region
      _
    $region21: #{tpu_custom_call.1} parent=1 // pred_fallthru
      _
    // Predicated region
    $region22: #{tpu_custom_call.1} parent=1 // pred_check
      _
    $region23: #{tpu_custom_call.1} parent=1 // pred_check_branch
      %54 = sbr.rel (0) target = $region25
    $region24: #{tpu_custom_call.1} parent=1 // pred_region
      %55 = dma.done [#allocation3], 2048
    $region25: #{tpu_custom_call.1} parent=1 // pred_fallthru
      _
    // Predicated region
    $region26: #{tpu_custom_call.1} parent=1 // pred_check
      _
    $region27: #{tpu_custom_call.1} parent=1 // pred_check_branch
      %57 = sbr.rel (0) target = $region29
    $region28: #{tpu_custom_call.1} parent=1 // pred_region
      %58 = dma.done [#allocation6], 8192
    $region29: #{tpu_custom_call.1} parent=1 // pred_fallthru
      _
    // Predicated region
    $region30: #{tpu_custom_call.1} parent=1 // pred_check
      _
    $region31: #{tpu_custom_call.1} parent=1 // pred_check_branch
      %60 = sbr.rel (0) target = $region33
    $region32: #{tpu_custom_call.1} parent=1 // pred_region
      %61 = dma.done [#allocation6], 2048
    $region33: #{tpu_custom_call.1} parent=1 // pred_fallthru
      _
    %v63 = vld [vmem:[#allocation2] sm:$0xff]
    %v64 = vld [vmem:[#allocation2 + $0x8] sm:$0xff]
    %v65 = vld [vmem:[#allocation2 + $0x10] sm:$0xff]
    %v66 = vld [vmem:[#allocation2 + $0x18] sm:$0xff]
    %v67 = vld [vmem:[#allocation2 + $0x20] sm:$0xff]
    %v68 = vld [vmem:[#allocation2 + $0x28] sm:$0xff]
    %v69 = vld [vmem:[#allocation2 + $0x30] sm:$0xff]
    %v70 = vld [vmem:[#allocation2 + $0x38] sm:$0xff]
    %v71 = vld [vmem:[#allocation2 + $0x40] sm:$0xff]
    %v72 = vld [vmem:[#allocation2 + $0x48] sm:$0xff]
    %v73 = vld [vmem:[#allocation2 + $0x50] sm:$0xff]
    %v74 = vld [vmem:[#allocation2 + $0x58] sm:$0xff]
    %v75 = vld [vmem:[#allocation2 + $0x60] sm:$0xff]
    %v76 = vld [vmem:[#allocation2 + $0x68] sm:$0xff]
    %v77 = vld [vmem:[#allocation2 + $0x70] sm:$0xff]
    %v78 = vld [vmem:[#allocation2 + $0x78] sm:$0xff]
    %v79 = vpack.c.bf16 %v67, %v63
    %v80 = vpack.c.bf16 %v68, %v64
    %v81 = vpack.c.bf16 %v69, %v65
    %v82 = vpack.c.bf16 %v70, %v66
    %v83 = vpack.c.bf16 %v75, %v71
    %v84 = vpack.c.bf16 %v76, %v72
    %v85 = vpack.c.bf16 %v77, %v73
    %v86 = vpack.c.bf16 %v78, %v74
    %v87 = vld [vmem:[#allocation5] sm:$0xff]
    %v88 = vld [vmem:[#allocation5 + $0x8] sm:$0xff]
    %v89 = vld [vmem:[#allocation5 + $0x10] sm:$0xff]
    %v90 = vld [vmem:[#allocation5 + $0x18] sm:$0xff]
    %v91 = vld [vmem:[#allocation5 + $0x20] sm:$0xff]
    %v92 = vld [vmem:[#allocation5 + $0x28] sm:$0xff]
    %v93 = vld [vmem:[#allocation5 + $0x30] sm:$0xff]
    %v94 = vld [vmem:[#allocation5 + $0x38] sm:$0xff]
    %v95 = vld [vmem:[#allocation5 + $0x40] sm:$0xff]
    %v96 = vld [vmem:[#allocation5 + $0x48] sm:$0xff]
    %v97 = vld [vmem:[#allocation5 + $0x50] sm:$0xff]
    %v98 = vld [vmem:[#allocation5 + $0x58] sm:$0xff]
    %v99 = vld [vmem:[#allocation5 + $0x60] sm:$0xff]
    %v100 = vld [vmem:[#allocation5 + $0x68] sm:$0xff]
    %v101 = vld [vmem:[#allocation5 + $0x70] sm:$0xff]
    %v102 = vld [vmem:[#allocation5 + $0x78] sm:$0xff]
    %v103 = vld [vmem:[#allocation5 + $0x80] sm:$0xff]
    %v104 = vld [vmem:[#allocation5 + $0x88] sm:$0xff]
    %v105 = vld [vmem:[#allocation5 + $0x90] sm:$0xff]
    %v106 = vld [vmem:[#allocation5 + $0x98] sm:$0xff]
    %v107 = vld [vmem:[#allocation5 + $0xa0] sm:$0xff]
    %v108 = vld [vmem:[#allocation5 + $0xa8] sm:$0xff]
    %v109 = vld [vmem:[#allocation5 + $0xb0] sm:$0xff]
    %v110 = vld [vmem:[#allocation5 + $0xb8] sm:$0xff]
    %v111 = vld [vmem:[#allocation5 + $0xc0] sm:$0xff]
    %v112 = vld [vmem:[#allocation5 + $0xc8] sm:$0xff]
    %v113 = vld [vmem:[#allocation5 + $0xd0] sm:$0xff]
    %v114 = vld [vmem:[#allocation5 + $0xd8] sm:$0xff]
    %v115 = vld [vmem:[#allocation5 + $0xe0] sm:$0xff]
    %v116 = vld [vmem:[#allocation5 + $0xe8] sm:$0xff]
    %v117 = vld [vmem:[#allocation5 + $0xf0] sm:$0xff]
    %v118 = vld [vmem:[#allocation5 + $0xf8] sm:$0xff]
    %v119 = vld [vmem:[#allocation5 + $0x100] sm:$0xff]
    %v120 = vld [vmem:[#allocation5 + $0x108] sm:$0xff]
    %v121 = vld [vmem:[#allocation5 + $0x110] sm:$0xff]
    %v122 = vld [vmem:[#allocation5 + $0x118] sm:$0xff]
    %v123 = vld [vmem:[#allocation5 + $0x120] sm:$0xff]
    %v124 = vld [vmem:[#allocation5 + $0x128] sm:$0xff]
    %v125 = vld [vmem:[#allocation5 + $0x130] sm:$0xff]
    %v126 = vld [vmem:[#allocation5 + $0x138] sm:$0xff]
    %v127 = vld [vmem:[#allocation5 + $0x140] sm:$0xff]
    %v128 = vld [vmem:[#allocation5 + $0x148] sm:$0xff]
    %v129 = vld [vmem:[#allocation5 + $0x150] sm:$0xff]
    %v130 = vld [vmem:[#allocation5 + $0x158] sm:$0xff]
    %v131 = vld [vmem:[#allocation5 + $0x160] sm:$0xff]
    %v132 = vld [vmem:[#allocation5 + $0x168] sm:$0xff]
    %v133 = vld [vmem:[#allocation5 + $0x170] sm:$0xff]
    %v134 = vld [vmem:[#allocation5 + $0x178] sm:$0xff]
    %v135 = vld [vmem:[#allocation5 + $0x180] sm:$0xff]
    %v136 = vld [vmem:[#allocation5 + $0x188] sm:$0xff]
    %v137 = vld [vmem:[#allocation5 + $0x190] sm:$0xff]
    %v138 = vld [vmem:[#allocation5 + $0x198] sm:$0xff]
    %v139 = vld [vmem:[#allocation5 + $0x1a0] sm:$0xff]
    %v140 = vld [vmem:[#allocation5 + $0x1a8] sm:$0xff]
    %v141 = vld [vmem:[#allocation5 + $0x1b0] sm:$0xff]
    %v142 = vld [vmem:[#allocation5 + $0x1b8] sm:$0xff]
    %v143 = vld [vmem:[#allocation5 + $0x1c0] sm:$0xff]
    %v144 = vld [vmem:[#allocation5 + $0x1c8] sm:$0xff]
    %v145 = vld [vmem:[#allocation5 + $0x1d0] sm:$0xff]
    %v146 = vld [vmem:[#allocation5 + $0x1d8] sm:$0xff]
    %v147 = vld [vmem:[#allocation5 + $0x1e0] sm:$0xff]
    %v148 = vld [vmem:[#allocation5 + $0x1e8] sm:$0xff]
    %v149 = vld [vmem:[#allocation5 + $0x1f0] sm:$0xff]
    %v150 = vld [vmem:[#allocation5 + $0x1f8] sm:$0xff]
    %v151 = vld [vmem:[%s2] sm:$0x3]
    %v153 = vlaneseq
    %v154 = vshrl.u32 %v153, 7
    %v155 = vsub.s32 0, %v154
    %v156 = vrot.slane %v151, %v155
    %v157 = vlaneseq
    %v158 = vshrl.u32 %v157, 7
    %v159 = vsub.s32 1, %v158
    %v160 = vrot.slane %v151, %v159
    %v227 = vunpack.c.l.b16 %v87
    %v228 = vunpack.c.h.b16 %v87
    %v229 = vunpack.c.l.b16 %v88
    %v230 = vunpack.c.h.b16 %v88
    %v231 = vunpack.c.l.b16 %v89
    %v232 = vunpack.c.h.b16 %v89
    %v233 = vunpack.c.l.b16 %v90
    %v234 = vunpack.c.h.b16 %v90
    %v235 = vunpack.c.l.b16 %v91
    %v236 = vunpack.c.h.b16 %v91
    %v237 = vunpack.c.l.b16 %v92
    %v238 = vunpack.c.h.b16 %v92
    %v239 = vunpack.c.l.b16 %v93
    %v240 = vunpack.c.h.b16 %v93
    %v241 = vunpack.c.l.b16 %v94
    %v242 = vunpack.c.h.b16 %v94
    %v243 = vunpack.c.l.b16 %v95
    %v244 = vunpack.c.h.b16 %v95
    %v245 = vunpack.c.l.b16 %v96
    %v246 = vunpack.c.h.b16 %v96
    %v247 = vunpack.c.l.b16 %v97
    %v248 = vunpack.c.h.b16 %v97
    %v249 = vunpack.c.l.b16 %v98
    %v250 = vunpack.c.h.b16 %v98
    %v251 = vunpack.c.l.b16 %v99
    %v252 = vunpack.c.h.b16 %v99
    %v253 = vunpack.c.l.b16 %v100
    %v254 = vunpack.c.h.b16 %v100
    %v255 = vunpack.c.l.b16 %v101
    %v256 = vunpack.c.h.b16 %v101
    %v257 = vunpack.c.l.b16 %v102
    %v258 = vunpack.c.h.b16 %v102
    %v259 = vunpack.c.l.b16 %v103
    %v260 = vunpack.c.h.b16 %v103
    %v261 = vunpack.c.l.b16 %v104
    %v262 = vunpack.c.h.b16 %v104
    %v263 = vunpack.c.l.b16 %v105
    %v264 = vunpack.c.h.b16 %v105
    %v265 = vunpack.c.l.b16 %v106
    %v266 = vunpack.c.h.b16 %v106
    %v267 = vunpack.c.l.b16 %v107
    %v268 = vunpack.c.h.b16 %v107
    %v269 = vunpack.c.l.b16 %v108
    %v270 = vunpack.c.h.b16 %v108
    %v271 = vunpack.c.l.b16 %v109
    %v272 = vunpack.c.h.b16 %v109
    %v273 = vunpack.c.l.b16 %v110
    %v274 = vunpack.c.h.b16 %v110
    %v275 = vunpack.c.l.b16 %v111
    %v276 = vunpack.c.h.b16 %v111
    %v277 = vunpack.c.l.b16 %v112
    %v278 = vunpack.c.h.b16 %v112
    %v279 = vunpack.c.l.b16 %v113
    %v280 = vunpack.c.h.b16 %v113
    %v281 = vunpack.c.l.b16 %v114
    %v282 = vunpack.c.h.b16 %v114
    %v283 = vunpack.c.l.b16 %v115
    %v284 = vunpack.c.h.b16 %v115
    %v285 = vunpack.c.l.b16 %v116
    %v286 = vunpack.c.h.b16 %v116
    %v287 = vunpack.c.l.b16 %v117
    %v288 = vunpack.c.h.b16 %v117
    %v289 = vunpack.c.l.b16 %v118
    %v290 = vunpack.c.h.b16 %v118
    %v291 = vunpack.c.l.b16 %v119
    %v292 = vunpack.c.h.b16 %v119
    %v293 = vunpack.c.l.b16 %v120
    %v294 = vunpack.c.h.b16 %v120
    %v295 = vunpack.c.l.b16 %v121
    %v296 = vunpack.c.h.b16 %v121
    %v297 = vunpack.c.l.b16 %v122
    %v298 = vunpack.c.h.b16 %v122
    %v299 = vunpack.c.l.b16 %v123
    %v300 = vunpack.c.h.b16 %v123
    %v301 = vunpack.c.l.b16 %v124
    %v302 = vunpack.c.h.b16 %v124
    %v303 = vunpack.c.l.b16 %v125
    %v304 = vunpack.c.h.b16 %v125
    %v305 = vunpack.c.l.b16 %v126
    %v306 = vunpack.c.h.b16 %v126
    %v307 = vunpack.c.l.b16 %v127
    %v308 = vunpack.c.h.b16 %v127
    %v309 = vunpack.c.l.b16 %v128
    %v310 = vunpack.c.h.b16 %v128
    %v311 = vunpack.c.l.b16 %v129
    %v312 = vunpack.c.h.b16 %v129
    %v313 = vunpack.c.l.b16 %v130
    %v314 = vunpack.c.h.b16 %v130
    %v315 = vunpack.c.l.b16 %v131
    %v316 = vunpack.c.h.b16 %v131
    %v317 = vunpack.c.l.b16 %v132
    %v318 = vunpack.c.h.b16 %v132
    %v319 = vunpack.c.l.b16 %v133
    %v320 = vunpack.c.h.b16 %v133
    %v321 = vunpack.c.l.b16 %v134
    %v322 = vunpack.c.h.b16 %v134
    %v323 = vunpack.c.l.b16 %v135
    %v324 = vunpack.c.h.b16 %v135
    %v325 = vunpack.c.l.b16 %v136
    %v326 = vunpack.c.h.b16 %v136
    %v327 = vunpack.c.l.b16 %v137
    %v328 = vunpack.c.h.b16 %v137
    %v329 = vunpack.c.l.b16 %v138
    %v330 = vunpack.c.h.b16 %v138
    %v331 = vunpack.c.l.b16 %v139
    %v332 = vunpack.c.h.b16 %v139
    %v333 = vunpack.c.l.b16 %v140
    %v334 = vunpack.c.h.b16 %v140
    %v335 = vunpack.c.l.b16 %v141
    %v336 = vunpack.c.h.b16 %v141
    %v337 = vunpack.c.l.b16 %v142
    %v338 = vunpack.c.h.b16 %v142
    %v339 = vunpack.c.l.b16 %v143
    %v340 = vunpack.c.h.b16 %v143
    %v341 = vunpack.c.l.b16 %v144
    %v342 = vunpack.c.h.b16 %v144
    %v343 = vunpack.c.l.b16 %v145
    %v344 = vunpack.c.h.b16 %v145
    %v345 = vunpack.c.l.b16 %v146
    %v346 = vunpack.c.h.b16 %v146
    %v347 = vunpack.c.l.b16 %v147
    %v348 = vunpack.c.h.b16 %v147
    %v349 = vunpack.c.l.b16 %v148
    %v350 = vunpack.c.h.b16 %v148
    %v351 = vunpack.c.l.b16 %v149
    %v352 = vunpack.c.h.b16 %v149
    %v353 = vunpack.c.l.b16 %v150
    %v354 = vunpack.c.h.b16 %v150
    %v355 = vpack.c.b16 %v229, %v227
    %v356 = vpack.c.b16 %v230, %v228
    %v357 = vpack.c.b16 %v233, %v231
    %v358 = vpack.c.b16 %v234, %v232
    %v359 = vpack.c.b16 %v237, %v235
    %v360 = vpack.c.b16 %v238, %v236
    %v361 = vpack.c.b16 %v241, %v239
    %v362 = vpack.c.b16 %v242, %v240
    %v363 = vpack.c.b16 %v245, %v243
    %v364 = vpack.c.b16 %v246, %v244
    %v365 = vpack.c.b16 %v249, %v247
    %v366 = vpack.c.b16 %v250, %v248
    %v367 = vpack.c.b16 %v253, %v251
    %v368 = vpack.c.b16 %v254, %v252
    %v369 = vpack.c.b16 %v257, %v255
    %v370 = vpack.c.b16 %v258, %v256
    %v371 = vpack.c.b16 %v261, %v259
    %v372 = vpack.c.b16 %v262, %v260
    %v373 = vpack.c.b16 %v265, %v263
    %v374 = vpack.c.b16 %v266, %v264
    %v375 = vpack.c.b16 %v269, %v267
    %v376 = vpack.c.b16 %v270, %v268
    %v377 = vpack.c.b16 %v273, %v271
    %v378 = vpack.c.b16 %v274, %v272
    %v379 = vpack.c.b16 %v277, %v275
    %v380 = vpack.c.b16 %v278, %v276
    %v381 = vpack.c.b16 %v281, %v279
    %v382 = vpack.c.b16 %v282, %v280
    %v383 = vpack.c.b16 %v285, %v283
    %v384 = vpack.c.b16 %v286, %v284
    %v385 = vpack.c.b16 %v289, %v287
    %v386 = vpack.c.b16 %v290, %v288
    %v387 = vpack.c.b16 %v293, %v291
    %v388 = vpack.c.b16 %v294, %v292
    %v389 = vpack.c.b16 %v297, %v295
    %v390 = vpack.c.b16 %v298, %v296
    %v391 = vpack.c.b16 %v301, %v299
    %v392 = vpack.c.b16 %v302, %v300
    %v393 = vpack.c.b16 %v305, %v303
    %v394 = vpack.c.b16 %v306, %v304
    %v395 = vpack.c.b16 %v309, %v307
    %v396 = vpack.c.b16 %v310, %v308
    %v397 = vpack.c.b16 %v313, %v311
    %v398 = vpack.c.b16 %v314, %v312
    %v399 = vpack.c.b16 %v317, %v315
    %v400 = vpack.c.b16 %v318, %v316
    %v401 = vpack.c.b16 %v321, %v319
    %v402 = vpack.c.b16 %v322, %v320
    %v403 = vpack.c.b16 %v325, %v323
    %v404 = vpack.c.b16 %v326, %v324
    %v405 = vpack.c.b16 %v329, %v327
    %v406 = vpack.c.b16 %v330, %v328
    %v407 = vpack.c.b16 %v333, %v331
    %v408 = vpack.c.b16 %v334, %v332
    %v409 = vpack.c.b16 %v337, %v335
    %v410 = vpack.c.b16 %v338, %v336
    %v411 = vpack.c.b16 %v341, %v339
    %v412 = vpack.c.b16 %v342, %v340
    %v413 = vpack.c.b16 %v345, %v343
    %v414 = vpack.c.b16 %v346, %v344
    %v415 = vpack.c.b16 %v349, %v347
    %v416 = vpack.c.b16 %v350, %v348
    %v417 = vpack.c.b16 %v353, %v351
    %v418 = vpack.c.b16 %v354, %v352
    %483 = vmatprep.subr.bf16.mxu0 %v370
    %484 = vmatpush1.bf16.msra.mxu0 %v369
    %485 = vmatprep.subr.bf16.mxu0 %v368
    %486 = vmatpush1.bf16.msra.mxu0 %v367
    %487 = vmatprep.subr.bf16.mxu0 %v366
    %488 = vmatpush1.bf16.msra.mxu0 %v365
    %489 = vmatprep.subr.bf16.mxu0 %v364
    %490 = vmatpush1.bf16.msra.mxu0 %v363
    %491 = vmatprep.subr.bf16.mxu0 %v362
    %492 = vmatpush1.bf16.msra.mxu0 %v361
    %493 = vmatprep.subr.bf16.mxu0 %v360
    %494 = vmatpush1.bf16.msra.mxu0 %v359
    %495 = vmatprep.subr.bf16.mxu0 %v358
    %496 = vmatpush1.bf16.msra.mxu0 %v357
    %497 = vmatprep.subr.bf16.mxu0 %v356
    %498 = vmatpush1.bf16.msra.mxu0 %v355
    %499 = vmatprep.subr.bf16.mxu0 %v386
    %500 = vmatpush2.bf16.msra.mxu0 %v385
    %501 = vmatprep.subr.bf16.mxu0 %v384
    %502 = vmatpush2.bf16.msra.mxu0 %v383
    %503 = vmatprep.subr.bf16.mxu0 %v382
    %504 = vmatpush2.bf16.msra.mxu0 %v381
    %505 = vmatprep.subr.bf16.mxu0 %v380
    %506 = vmatpush2.bf16.msra.mxu0 %v379
    %507 = vmatprep.subr.bf16.mxu0 %v378
    %508 = vmatpush2.bf16.msra.mxu0 %v377
    %509 = vmatprep.subr.bf16.mxu0 %v376
    %510 = vmatpush2.bf16.msra.mxu0 %v375
    %511 = vmatprep.subr.bf16.mxu0 %v374
    %512 = vmatpush2.bf16.msra.mxu0 %v373
    %513 = vmatprep.subr.bf16.mxu0 %v372
    %514 = vmatpush2.bf16.msra.mxu0 %v371
    %515 = vmatprep.mubr.bf16.mxu0 %v80
    %516 = vmatmul.mubr.bf16.gmra.mxu0 %v79
    %v517 = vpop.f32.mrf.mxu0
    %v518 = vadd.f32 %v156, %v517
    %v519 = vpop.f32.mrf.mxu0
    %v520 = vadd.f32 %v160, %v519
    %v521 = vpop.f32.mrf.mxu0
    %v522 = vadd.f32 %v156, %v521
    %v523 = vpop.f32.mrf.mxu0
    %v524 = vadd.f32 %v160, %v523
    %525 = vmatprep.mubr.bf16.mxu0 %v84
    %526 = vmatmul.mubr.bf16.gmra.mxu0 %v83
    %v527 = vpop.f32.mrf.mxu0
    %v528 = vadd.f32 %v156, %v527
    %v529 = vpop.f32.mrf.mxu0
    %v530 = vadd.f32 %v160, %v529
    %v531 = vpop.f32.mrf.mxu0
    %v532 = vadd.f32 %v156, %v531
    %v533 = vpop.f32.mrf.mxu0
    %v534 = vadd.f32 %v160, %v533
    %535 = vdwg.mxu0
    %536 = vmatprep.subr.bf16.mxu0 %v402
    %537 = vmatpush1.bf16.msra.mxu0 %v401
    %538 = vmatprep.subr.bf16.mxu0 %v400
    %539 = vmatpush1.bf16.msra.mxu0 %v399
    %540 = vmatprep.subr.bf16.mxu0 %v398
    %541 = vmatpush1.bf16.msra.mxu0 %v397
    %542 = vmatprep.subr.bf16.mxu0 %v396
    %543 = vmatpush1.bf16.msra.mxu0 %v395
    %544 = vmatprep.subr.bf16.mxu0 %v394
    %545 = vmatpush1.bf16.msra.mxu0 %v393
    %546 = vmatprep.subr.bf16.mxu0 %v392
    %547 = vmatpush1.bf16.msra.mxu0 %v391
    %548 = vmatprep.subr.bf16.mxu0 %v390
    %549 = vmatpush1.bf16.msra.mxu0 %v389
    %550 = vmatprep.subr.bf16.mxu0 %v388
    %551 = vmatpush1.bf16.msra.mxu0 %v387
    %552 = vmatprep.subr.bf16.mxu0 %v418
    %553 = vmatpush2.bf16.msra.mxu0 %v417
    %554 = vmatprep.subr.bf16.mxu0 %v416
    %555 = vmatpush2.bf16.msra.mxu0 %v415
    %556 = vmatprep.subr.bf16.mxu0 %v414
    %557 = vmatpush2.bf16.msra.mxu0 %v413
    %558 = vmatprep.subr.bf16.mxu0 %v412
    %559 = vmatpush2.bf16.msra.mxu0 %v411
    %560 = vmatprep.subr.bf16.mxu0 %v410
    %561 = vmatpush2.bf16.msra.mxu0 %v409
    %562 = vmatprep.subr.bf16.mxu0 %v408
    %563 = vmatpush2.bf16.msra.mxu0 %v407
    %564 = vmatprep.subr.bf16.mxu0 %v406
    %565 = vmatpush2.bf16.msra.mxu0 %v405
    %566 = vmatprep.subr.bf16.mxu0 %v404
    %567 = vmatpush2.bf16.msra.mxu0 %v403
    %568 = vmatprep.mubr.bf16.mxu0 %v82
    %569 = vmatmul.mubr.bf16.gmra.mxu0 %v81
    %v570 = vpop.f32.mrf.mxu0
    %v571 = vadd.f32 %v518, %v570
    %v572 = vpop.f32.mrf.mxu0
    %v573 = vadd.f32 %v520, %v572
    %v574 = vpop.f32.mrf.mxu0
    %v575 = vadd.f32 %v522, %v574
    %v576 = vpop.f32.mrf.mxu0
    %v577 = vadd.f32 %v524, %v576
    %578 = vmatprep.mubr.bf16.mxu0 %v86
    %579 = vmatmul.mubr.bf16.gmra.mxu0 %v85
    %v580 = vpop.f32.mrf.mxu0
    %v581 = vadd.f32 %v528, %v580
    %v582 = vpop.f32.mrf.mxu0
    %v583 = vadd.f32 %v530, %v582
    %v584 = vpop.f32.mrf.mxu0
    %v585 = vadd.f32 %v532, %v584
    %v586 = vpop.f32.mrf.mxu0
    %v587 = vadd.f32 %v534, %v586
    %588 = vdwg.mxu0
    %v589 = vmax.f32 %v571, 0.0
    %v590 = vmax.f32 %v573, 0.0
    %v591 = vmax.f32 %v575, 0.0
    %v592 = vmax.f32 %v577, 0.0
    %v593 = vmax.f32 %v581, 0.0
    %v594 = vmax.f32 %v583, 0.0
    %v595 = vmax.f32 %v585, 0.0
    %v596 = vmax.f32 %v587, 0.0
    %v597 = vpack.c.bf16 %v591, %v589
    %v598 = vpack.c.bf16 %v592, %v590
    %v599 = vpack.c.bf16 %v595, %v593
    %v600 = vpack.c.bf16 %v596, %v594
    %v601 = vld [vmem:[#allocation7] sm:$0xf]
    %v602 = vld [vmem:[#allocation7 + $0x4] sm:$0xf]
    %v603 = vld [vmem:[#allocation7 + $0x8] sm:$0xf]
    %v604 = vld [vmem:[#allocation7 + $0xc] sm:$0xf]
    %v605 = vld [vmem:[#allocation7 + $0x10] sm:$0xf]
    %v606 = vld [vmem:[#allocation7 + $0x14] sm:$0xf]
    %v607 = vld [vmem:[#allocation7 + $0x18] sm:$0xf]
    %v608 = vld [vmem:[#allocation7 + $0x1c] sm:$0xf]
    %v609 = vld [vmem:[#allocation7 + $0x20] sm:$0xf]
    %v610 = vld [vmem:[#allocation7 + $0x24] sm:$0xf]
    %v611 = vld [vmem:[#allocation7 + $0x28] sm:$0xf]
    %v612 = vld [vmem:[#allocation7 + $0x2c] sm:$0xf]
    %v613 = vld [vmem:[#allocation7 + $0x30] sm:$0xf]
    %v614 = vld [vmem:[#allocation7 + $0x34] sm:$0xf]
    %v615 = vld [vmem:[#allocation7 + $0x38] sm:$0xf]
    %v616 = vld [vmem:[#allocation7 + $0x3c] sm:$0xf]
    %v617 = vld [vmem:[#allocation7 + $0x40] sm:$0xf]
    %v618 = vld [vmem:[#allocation7 + $0x44] sm:$0xf]
    %v619 = vld [vmem:[#allocation7 + $0x48] sm:$0xf]
    %v620 = vld [vmem:[#allocation7 + $0x4c] sm:$0xf]
    %v621 = vld [vmem:[#allocation7 + $0x50] sm:$0xf]
    %v622 = vld [vmem:[#allocation7 + $0x54] sm:$0xf]
    %v623 = vld [vmem:[#allocation7 + $0x58] sm:$0xf]
    %v624 = vld [vmem:[#allocation7 + $0x5c] sm:$0xf]
    %v625 = vld [vmem:[#allocation7 + $0x60] sm:$0xf]
    %v626 = vld [vmem:[#allocation7 + $0x64] sm:$0xf]
    %v627 = vld [vmem:[#allocation7 + $0x68] sm:$0xf]
    %v628 = vld [vmem:[#allocation7 + $0x6c] sm:$0xf]
    %v629 = vld [vmem:[#allocation7 + $0x70] sm:$0xf]
    %v630 = vld [vmem:[#allocation7 + $0x74] sm:$0xf]
    %v631 = vld [vmem:[#allocation7 + $0x78] sm:$0xf]
    %v632 = vld [vmem:[#allocation7 + $0x7c] sm:$0xf]
    %v633 = vld [vmem:[%s4] sm:$0x1]
    %v635 = vlaneseq
    %v636 = vshrl.u32 %v635, 7
    %v637 = vsub.s32 0, %v636
    %v638 = vrot.slane %v633, %v637
    %v672 = vunpack.c.l.b16 %v601
    %v673 = vunpack.c.l.b16 %v602
    %v674 = vunpack.c.l.b16 %v603
    %v675 = vunpack.c.l.b16 %v604
    %v676 = vunpack.c.l.b16 %v605
    %v677 = vunpack.c.l.b16 %v606
    %v678 = vunpack.c.l.b16 %v607
    %v679 = vunpack.c.l.b16 %v608
    %v680 = vunpack.c.l.b16 %v609
    %v681 = vunpack.c.l.b16 %v610
    %v682 = vunpack.c.l.b16 %v611
    %v683 = vunpack.c.l.b16 %v612
    %v684 = vunpack.c.l.b16 %v613
    %v685 = vunpack.c.l.b16 %v614
    %v686 = vunpack.c.l.b16 %v615
    %v687 = vunpack.c.l.b16 %v616
    %v688 = vunpack.c.l.b16 %v617
    %v689 = vunpack.c.l.b16 %v618
    %v690 = vunpack.c.l.b16 %v619
    %v691 = vunpack.c.l.b16 %v620
    %v692 = vunpack.c.l.b16 %v621
    %v693 = vunpack.c.l.b16 %v622
    %v694 = vunpack.c.l.b16 %v623
    %v695 = vunpack.c.l.b16 %v624
    %v696 = vunpack.c.l.b16 %v625
    %v697 = vunpack.c.l.b16 %v626
    %v698 = vunpack.c.l.b16 %v627
    %v699 = vunpack.c.l.b16 %v628
    %v700 = vunpack.c.l.b16 %v629
    %v701 = vunpack.c.l.b16 %v630
    %v702 = vunpack.c.l.b16 %v631
    %v703 = vunpack.c.l.b16 %v632
    %v704 = vpack.c.b16 %v673, %v672
    %v705 = vpack.c.b16 %v675, %v674
    %v706 = vpack.c.b16 %v677, %v676
    %v707 = vpack.c.b16 %v679, %v678
    %v708 = vpack.c.b16 %v681, %v680
    %v709 = vpack.c.b16 %v683, %v682
    %v710 = vpack.c.b16 %v685, %v684
    %v711 = vpack.c.b16 %v687, %v686
    %v712 = vpack.c.b16 %v689, %v688
    %v713 = vpack.c.b16 %v691, %v690
    %v714 = vpack.c.b16 %v693, %v692
    %v715 = vpack.c.b16 %v695, %v694
    %v716 = vpack.c.b16 %v697, %v696
    %v717 = vpack.c.b16 %v699, %v698
    %v718 = vpack.c.b16 %v701, %v700
    %v719 = vpack.c.b16 %v703, %v702
    %736 = vmatprep.subr.bf16.mxu0 0
    %737 = vmatpush1.bf16.msra.mxu0 %v711
    %738 = vmatprep.subr.bf16.mxu0 0
    %739 = vmatpush1.bf16.msra.mxu0 %v710
    %740 = vmatprep.subr.bf16.mxu0 0
    %741 = vmatpush1.bf16.msra.mxu0 %v709
    %742 = vmatprep.subr.bf16.mxu0 0
    %743 = vmatpush1.bf16.msra.mxu0 %v708
    %744 = vmatprep.subr.bf16.mxu0 0
    %745 = vmatpush1.bf16.msra.mxu0 %v707
    %746 = vmatprep.subr.bf16.mxu0 0
    %747 = vmatpush1.bf16.msra.mxu0 %v706
    %748 = vmatprep.subr.bf16.mxu0 0
    %749 = vmatpush1.bf16.msra.mxu0 %v705
    %750 = vmatprep.subr.bf16.mxu0 0
    %751 = vmatpush1.bf16.msra.mxu0 %v704
    %752 = vmatprep.subr.bf16.mxu0 0
    %753 = vmatpush2.bf16.msra.mxu0 %v719
    %754 = vmatprep.subr.bf16.mxu0 0
    %755 = vmatpush2.bf16.msra.mxu0 %v718
    %756 = vmatprep.subr.bf16.mxu0 0
    %757 = vmatpush2.bf16.msra.mxu0 %v717
    %758 = vmatprep.subr.bf16.mxu0 0
    %759 = vmatpush2.bf16.msra.mxu0 %v716
    %760 = vmatprep.subr.bf16.mxu0 0
    %761 = vmatpush2.bf16.msra.mxu0 %v715
    %762 = vmatprep.subr.bf16.mxu0 0
    %763 = vmatpush2.bf16.msra.mxu0 %v714
    %764 = vmatprep.subr.bf16.mxu0 0
    %765 = vmatpush2.bf16.msra.mxu0 %v713
    %766 = vmatprep.subr.bf16.mxu0 0
    %767 = vmatpush2.bf16.msra.mxu0 %v712
    %768 = vmatprep.mubr.bf16.mxu0 %v598
    %769 = vmatmul.mubr.bf16.gmra.mxu0 %v597
    %v770 = vpop.f32.mrf.mxu0
    %v771 = vadd.f32 %v638, %v770
    %v772 = vpop.f32.mrf.mxu0
    %v773 = vpop.f32.mrf.mxu0
    %v774 = vadd.f32 %v638, %v773
    %v775 = vpop.f32.mrf.mxu0
    %776 = vmatprep.mubr.bf16.mxu0 %v600
    %777 = vmatmul.mubr.bf16.gmra.mxu0 %v599
    %v778 = vpop.f32.mrf.mxu0
    %v779 = vadd.f32 %v638, %v778
    %v780 = vpop.f32.mrf.mxu0
    %v781 = vpop.f32.mrf.mxu0
    %v782 = vadd.f32 %v638, %v781
    %v783 = vpop.f32.mrf.mxu0
    %784 = vdwg.mxu0
    %v785 = vmax.f32 %v771, 0.0
    %v786 = vmax.f32 %v774, 0.0
    %v787 = vmax.f32 %v779, 0.0
    %v788 = vmax.f32 %v782, 0.0
    %789 = vst [vmem:[#allocation8] sm:$0xff] %v785
    %790 = vst [vmem:[#allocation8 + $0x8] sm:$0xff] %v786
    %791 = vst [vmem:[#allocation8 + $0x10] sm:$0xff] %v787
    %792 = vst [vmem:[#allocation8 + $0x18] sm:$0xff] %v788
    // Predicated region
    $region34: #{tpu_custom_call.1} parent=1 // pred_check
      _
    $region35: #{tpu_custom_call.1} parent=1 // pred_check_branch
      %794 = sbr.rel (0) target = $region37
    $region36: #{tpu_custom_call.1} parent=1 // pred_region
      %s796 = ssub.s32 512, 512
      %797 = vsyncadd [#allocation4], %s796
      %s798 = sshll.u32 [#allocation8], 4
      %s799 = int_to_ptr.vmem [resolvable:$true] %s798
      %804 = dma.vmem_to_hbm [thread:$0]  %s799, 512, %s5, [#allocation4], 128, 128, 8
    $region37: #{tpu_custom_call.1} parent=1 // pred_fallthru
      _
    // Predicated region
    $region38: #{tpu_custom_call.1} parent=1 // pred_check
      _
    $region39: #{tpu_custom_call.1} parent=1 // pred_check_branch
      %806 = sbr.rel (0) target = $region41
    $region40: #{tpu_custom_call.1} parent=1 // pred_region
      %807 = dma.done [#allocation4], 512
    $region41: #{tpu_custom_call.1} parent=1 // pred_fallthru
      _
    %808 = vsyncpa [#allocation3], 1
    %809 = vsyncpa [#allocation6], 1
    %810 = vsyncpa [#allocation4], 1

</llo_original>
